<compile_context>
chip_gen: v5e
topology: v5e:2x2
jax: 0.10.0
libtpu: 0.0.40
codegen_flags: <defaults>
</compile_context>

<pallas_src>
import jax
import jax.numpy as jnp
from jax.experimental import pallas as pl
from jax.experimental.pallas import tpu as pltpu


def _round_up(n: int, m: int) -> int:
    return ((n + m - 1) // m) * m


def mlp_kernel(x_ref, w1_ref, b1_ref, w2_ref, b2_ref, o_ref):
    C = o_ref.shape[-1]
    # Cast streamed f32 x to bf16 on the VPU (huge slack) right before the MXU.
    x = x_ref[...].astype(jnp.bfloat16)
    # fc1: (TB, In)bf16 @ (In, Hp)bf16 -> f32 accumulation on the MXU.
    h = jnp.dot(x, w1_ref[...], preferred_element_type=jnp.float32)
    # Bias + ReLU epilogue in f32 (padded Hp columns stay exactly 0).
    h = jnp.maximum(h + b1_ref[...], 0.0)
    # fc2: bf16 operands, f32 accumulation; result is lane-dense (TB, Cp).
    y = jnp.dot(h.astype(jnp.bfloat16), w2_ref[...],
                preferred_element_type=jnp.float32)
    # Write only the real C class columns back to HBM (tiny contiguous DMA).
    o_ref[...] = (y[:, :C] + b2_ref[...]).astype(o_ref.dtype)


def prepare_params(w1, b1, w2, b2):
    """One-time, parameter-load-time weight prep (hoisted out of the forward).

    w1: (In, H); b1: (H,); w2: (H, C); b2: (C,).
    Returns bf16 weights padded to lane-dense shapes and f32 biases.
    """
    In, H = w1.shape
    C = w2.shape[1]
    Hp = _round_up(H, 128)
    Cp = _round_up(C, 128)
    w1p = jnp.zeros((In, Hp), jnp.bfloat16).at[:, :H].set(w1.astype(jnp.bfloat16))
    b1p = jnp.zeros((1, Hp), jnp.float32).at[:, :H].set(b1.astype(jnp.float32))
    w2p = jnp.zeros((Hp, Cp), jnp.bfloat16).at[:H, :C].set(w2.astype(jnp.bfloat16))
    b2r = b2.astype(jnp.float32).reshape(1, C)
    return w1p, b1p, w2p, b2r


def _choose_tile_b(B: int, tile_b: int) -> int:
    """Batch-tile size: multiple of 8 sublanes; >= 2 tiles for large batches so
    the 'parallel' axis can shard across v7x's two TensorCores."""
    tile_b = max(8, _round_up(tile_b, 8))
    Bp = _round_up(B, 8)
    if Bp <= 512 or Bp <= 16:
        return min(Bp, tile_b)           # single small tile, no split needed
    if Bp <= tile_b:
        return max(256, _round_up((Bp + 1) // 2, 256))   # >= 2 tiles
    return tile_b


def simple_classifier_forward(x, w1p, b1p, w2p, b2r, *, tile_b=2048):
    """x: (B, In) f32; prepared params from prepare_params(). Returns (B, C) f32."""
    B, In = x.shape
    Hp = w1p.shape[1]
    Cp = w2p.shape[1]
    C = b2r.shape[1]

    TB = _choose_tile_b(B, tile_b)
    num_tiles = pl.cdiv(B, TB)
    Bp = num_tiles * TB

    xin = x
    if Bp != B:
        # Ragged last tile only: pad with zero rows (sliced away below).
        xin = jnp.zeros((Bp, In), x.dtype).at[:B, :].set(x)

    itemsize = jnp.dtype(x.dtype).itemsize
    cost = pl.CostEstimate(
        flops=2 * Bp * (In * Hp + Hp * Cp),
        transcendentals=0,
        bytes_accessed=(Bp * In * itemsize            # x read
                        + In * Hp * 2 + Hp * 4        # w1p + b1p
                        + Hp * Cp * 2 + C * 4         # w2p + b2
                        + Bp * C * 4),                # out write
    )

    out = pl.pallas_call(
        mlp_kernel,
        out_shape=jax.ShapeDtypeStruct((Bp, C), jnp.float32),
        grid_spec=pl.GridSpec(
            grid=(num_tiles,),
            in_specs=[
                # Streamed operand: one f32 batch tile per grid step.
                pl.BlockSpec((TB, In), lambda i: (i, 0)),
                # Weights / biases: constant block index -> resident in VMEM.
                pl.BlockSpec((In, Hp), lambda i: (0, 0)),
                pl.BlockSpec((1, Hp), lambda i: (0, 0)),
                pl.BlockSpec((Hp, Cp), lambda i: (0, 0)),
                pl.BlockSpec((1, C), lambda i: (0, 0)),
            ],
            # Full (unpadded) class dim in the output block: contiguous HBM
            # writeback of exactly B*C*4 bytes, no padded-zero traffic.
            out_specs=pl.BlockSpec((TB, C), lambda i: (i, 0)),
        ),
        compiler_params=pltpu.CompilerParams(
            dimension_semantics=("parallel",),
        ),
        cost_estimate=cost,
    )(xin, w1p, b1p, w2p, b2r)

    return out[:B] if Bp != B else out


if __name__ == "__main__":
    # Small shapes consistent with the module's forward: Linear -> ReLU -> Linear.
    batch = 8
    input_size = 32
    hidden_size = 32
    num_classes = 4

    key = jax.random.PRNGKey(0)
    kx, kw1, kb1, kw2, kb2 = jax.random.split(key, 5)

    x = jax.random.normal(kx, (batch, input_size), dtype=jnp.float32)

    # Deterministic init mimicking nn.Linear's uniform(-1/sqrt(fan_in), 1/sqrt(fan_in)).
    bound1 = 1.0 / (input_size ** 0.5)
    w1 = jax.random.uniform(kw1, (input_size, hidden_size),
                            minval=-bound1, maxval=bound1, dtype=jnp.float32)
    b1 = jax.random.uniform(kb1, (hidden_size,),
                            minval=-bound1, maxval=bound1, dtype=jnp.float32)

    bound2 = 1.0 / (hidden_size ** 0.5)
    w2 = jax.random.uniform(kw2, (hidden_size, num_classes),
                            minval=-bound2, maxval=bound2, dtype=jnp.float32)
    b2 = jax.random.uniform(kb2, (num_classes,),
                            minval=-bound2, maxval=bound2, dtype=jnp.float32)

    # One-time parameter prep (hoisted out of the per-call forward).
    w1p, b1p, w2p, b2r = prepare_params(w1, b1, w2, b2)

    out = simple_classifier_forward(x, w1p, b1p, w2p, b2r)
    jax.block_until_ready(out)
    assert out.shape == (batch, num_classes)

    # Reference 1: same bf16-operand / f32-accumulate math in plain JAX (tight check).
    xb = x.astype(jnp.bfloat16)
    h_ref = jnp.maximum(
        jnp.dot(xb, w1.astype(jnp.bfloat16), preferred_element_type=jnp.float32) + b1,
        0.0)
    ref_bf16 = jnp.dot(h_ref.astype(jnp.bfloat16), w2.astype(jnp.bfloat16),
                       preferred_element_type=jnp.float32) + b2
    assert jnp.allclose(out, ref_bf16, atol=2e-3, rtol=2e-3)

    # Reference 2: full-f32 PyTorch-equivalent math (loose check for bf16 rounding).
    ref_f32 = jnp.maximum(x @ w1 + b1, 0.0) @ w2 + b2
    assert jnp.allclose(out, ref_f32, atol=5e-2, rtol=5e-2)

    print("KERNEL_OK")
</pallas_src>

<mosaic_0001>
module attributes {stable_mosaic.version = 11 : i64} {
  func.func @mlp_kernel(%arg0: i32, %arg1: memref<8x32xf32, #tpu.memory_space<vmem>>, %arg2: memref<32x128xbf16, #tpu.memory_space<vmem>>, %arg3: memref<1x128xf32, #tpu.memory_space<vmem>>, %arg4: memref<128x128xbf16, #tpu.memory_space<vmem>>, %arg5: memref<1x4xf32, #tpu.memory_space<vmem>>, %arg6: memref<8x4xf32, #tpu.memory_space<vmem>>) attributes {dimension_semantics = [#tpu.dimension_semantics<parallel>], iteration_bounds = array<i64: 1>, scalar_prefetch = 0 : i64, scratch_operands = 0 : i64, tpu.core_type = #tpu.core_type<tc>, window_params = [{transform_indices = @transform_0, window_bounds = array<i64: 8, 32>}, {pipeline_mode = #tpu.pipeline_mode<synchronous>, transform_indices = @transform_1, window_bounds = array<i64: 32, 128>}, {pipeline_mode = #tpu.pipeline_mode<synchronous>, transform_indices = @transform_2, window_bounds = array<i64: 1, 128>}, {pipeline_mode = #tpu.pipeline_mode<synchronous>, transform_indices = @transform_3, window_bounds = array<i64: 128, 128>}, {pipeline_mode = #tpu.pipeline_mode<synchronous>, transform_indices = @transform_4, window_bounds = array<i64: 1, 4>}, {transform_indices = @transform_5, window_bounds = array<i64: 8, 4>}]} {
    %c0 = arith.constant 0 : index
    %c0_0 = arith.constant 0 : index
    %0 = vector.load %arg1[%c0, %c0_0] : memref<8x32xf32, #tpu.memory_space<vmem>>, vector<8x32xf32>
    %1 = arith.truncf %0 : vector<8x32xf32> to vector<8x32xbf16>
    %c0_1 = arith.constant 0 : index
    %c0_2 = arith.constant 0 : index
    %2 = vector.load %arg2[%c0_1, %c0_2] : memref<32x128xbf16, #tpu.memory_space<vmem>>, vector<32x128xbf16>
    %cst = arith.constant dense<0.000000e+00> : vector<8x128xf32>
    %3 = tpu.matmul %1, %2, %cst {dimension_numbers = #tpu.dot_dimension_numbers<[1], [0], [0], [1], [0, 0, 1, 1], [], []>} : vector<8x32xbf16>, vector<32x128xbf16>, vector<8x128xf32> -> vector<8x128xf32>
    %c0_3 = arith.constant 0 : index
    %c0_4 = arith.constant 0 : index
    %4 = vector.load %arg3[%c0_3, %c0_4] : memref<1x128xf32, #tpu.memory_space<vmem>>, vector<1x128xf32>
    %5 = vector.broadcast %4 : vector<1x128xf32> to vector<8x128xf32>
    %6 = arith.addf %3, %5 : vector<8x128xf32>
    %cst_5 = arith.constant 0.000000e+00 : f32
    %7 = vector.broadcast %cst_5 : f32 to vector<8x128xf32>
    %8 = arith.maximumf %6, %7 : vector<8x128xf32>
    %9 = arith.truncf %8 : vector<8x128xf32> to vector<8x128xbf16>
    %c0_6 = arith.constant 0 : index
    %c0_7 = arith.constant 0 : index
    %10 = vector.load %arg4[%c0_6, %c0_7] : memref<128x128xbf16, #tpu.memory_space<vmem>>, vector<128x128xbf16>
    %cst_8 = arith.constant dense<0.000000e+00> : vector<8x128xf32>
    %11 = tpu.matmul %9, %10, %cst_8 {dimension_numbers = #tpu.dot_dimension_numbers<[1], [0], [0], [1], [0, 0, 1, 1], [], []>} : vector<8x128xbf16>, vector<128x128xbf16>, vector<8x128xf32> -> vector<8x128xf32>
    %12 = vector.extract_strided_slice %11 {offsets = [0, 0], sizes = [8, 4], strides = [1, 1]} : vector<8x128xf32> to vector<8x4xf32>
    %c0_9 = arith.constant 0 : index
    %c0_10 = arith.constant 0 : index
    %13 = vector.load %arg5[%c0_9, %c0_10] : memref<1x4xf32, #tpu.memory_space<vmem>>, vector<1x4xf32>
    %14 = vector.broadcast %13 : vector<1x4xf32> to vector<8x4xf32>
    %15 = arith.addf %12, %14 : vector<8x4xf32>
    %c0_11 = arith.constant 0 : index
    %c0_12 = arith.constant 0 : index
    %16 = vector.load %arg6[%c0_11, %c0_12] : memref<8x4xf32, #tpu.memory_space<vmem>>, vector<8x4xf32>
    tpu.vector_store %arg6[%c0_11, %c0_12], %15 {strides = array<i32>} : memref<8x4xf32, #tpu.memory_space<vmem>>, vector<8x4xf32>,
    return
  }
  func.func @transform_0(%arg0: i32) -> (i32, i32) {
    %c0_i32 = arith.constant 0 : i32
    %c0_i32_0 = arith.constant 0 : i32
    return %arg0, %c0_i32 : i32, i32
  }
  func.func @transform_1(%arg0: i32) -> (i32, i32) {
    %c0_i32 = arith.constant 0 : i32
    %c0_i32_0 = arith.constant 0 : i32
    %c0_i32_1 = arith.constant 0 : i32
    return %c0_i32, %c0_i32_0 : i32, i32
  }
  func.func @transform_2(%arg0: i32) -> (i32, i32) {
    %c0_i32 = arith.constant 0 : i32
    %c0_i32_0 = arith.constant 0 : i32
    %c0_i32_1 = arith.constant 0 : i32
    return %c0_i32, %c0_i32_0 : i32, i32
  }
  func.func @transform_3(%arg0: i32) -> (i32, i32) {
    %c0_i32 = arith.constant 0 : i32
    %c0_i32_0 = arith.constant 0 : i32
    %c0_i32_1 = arith.constant 0 : i32
    return %c0_i32, %c0_i32_0 : i32, i32
  }
  func.func @transform_4(%arg0: i32) -> (i32, i32) {
    %c0_i32 = arith.constant 0 : i32
    %c0_i32_0 = arith.constant 0 : i32
    %c0_i32_1 = arith.constant 0 : i32
    return %c0_i32, %c0_i32_0 : i32, i32
  }
  func.func @transform_5(%arg0: i32) -> (i32, i32) {
    %c0_i32 = arith.constant 0 : i32
    %c0_i32_0 = arith.constant 0 : i32
    return %arg0, %c0_i32 : i32, i32
  }
}

</mosaic_0001>

<llo_original>
// kernel: tpu_custom_call.1
$region0: #{tpu_custom_call.1}
  #allocation0 [shape = 'u32[]', space=smem, size = 0x4, offset = 0x4, fixed_abs, tag = 'smem constant byte address 0x4 - core index']
  #allocation1 [shape = 'u32[72,128]{1,0:T(1,128)}', space=vmem, size = 0x9000, scoped, tag = 'internal scratch']
  %s0 = inlined_call_operand.hbm [shape: f32[8,32], index: 0, kind: input, shape index: {}]
  %s1 = inlined_call_operand.hbm [shape: bf16[32,128], index: 1, kind: input, shape index: {}]
  %s2 = inlined_call_operand.vmem [shape: f32[1,128], index: 2, kind: input, shape index: {}]
  %s3 = inlined_call_operand.hbm [shape: bf16[128,128], index: 3, kind: input, shape index: {}]
  %s4 = inlined_call_operand.vmem [shape: f32[1,4], index: 4, kind: input, shape index: {}]
  %s5 = inlined_call_operand.vmem [shape: f32[8,4], index: 5, kind: output, shape index: {}]
  %s6 = sld [smem:[#allocation0]]
  $region42: #{tpu_custom_call.1} parent=0
    _
  %s8 = ssub.s32 1, %s6
  %s9 = scalar_select 0, %s8, %s6
  $region1: #{tpu_custom_call.1} parent=0
    #allocation2 [shape = 'u8[4096]{0}', space=vmem, size = 0x1000, scoped, tag = 'input window, operand 0, single buffered']
    #allocation3 [shape = 's32[1]{0}', space=sflag, size = 0x4, scoped, tag = 'scoped memory for tpu_custom_call.1']
    #allocation4 [shape = 'u8[8192]{0}', space=vmem, size = 0x2000, scoped, tag = 'input window, operand 1, single buffered']
    #allocation5 [shape = 's32[1]{0}', space=sflag, size = 0x4, scoped, tag = 'scoped memory for tpu_custom_call.1']
    #allocation6 [shape = 'u8[32768]{0}', space=vmem, size = 0x8000, scoped, tag = 'input window, operand 3, single buffered']
    %10 = vsyncpa [#allocation3], 0
    %11 = vsyncpa [#allocation5], 0
    // Predicated region
    $region2: #{tpu_custom_call.1} parent=1 // pred_check
      _
    $region3: #{tpu_custom_call.1} parent=1 // pred_check_branch
      %13 = sbr.rel (0) target = $region5
    $region4: #{tpu_custom_call.1} parent=1 // pred_region
      %15 = vsyncadd [#allocation3], 0
      %s17 = sshll.u32 %s0, 4
      %s18 = int_to_ptr.hbm [resolvable:$true] %s17
      %s19 = sshll.u32 [#allocation2], 4
      %s20 = int_to_ptr.vmem [resolvable:$true] %s19
      %22 = dma.hbm_to_vmem [thread:$0]  %s18, 128, %s20, [#allocation3]
    $region5: #{tpu_custom_call.1} parent=1 // pred_fallthru
      _
    // Predicated region
    $region6: #{tpu_custom_call.1} parent=1 // pred_check
      _
    $region7: #{tpu_custom_call.1} parent=1 // pred_check_branch
      %24 = sbr.rel (0) target = $region9
    $region8: #{tpu_custom_call.1} parent=1 // pred_region
      %26 = vsyncadd [#allocation5], 0
      %s27 = sshll.u32 %s1, 4
      %s28 = int_to_ptr.hbm [resolvable:$true] %s27
      %s29 = sshll.u32 [#allocation4], 4
      %s30 = int_to_ptr.vmem [resolvable:$true] %s29
      %35 = dma.hbm_to_vmem [thread:$0]  %s28, 256, %s30, [#allocation5], 64, 64, 4
    $region9: #{tpu_custom_call.1} parent=1 // pred_fallthru
      _
    // Predicated region
    $region10: #{tpu_custom_call.1} parent=1 // pred_check
      _
    $region11: #{tpu_custom_call.1} parent=1 // pred_check_branch
      %37 = sbr.rel (0) target = $region13
    $region12: #{tpu_custom_call.1} parent=1 // pred_region
      _
    $region13: #{tpu_custom_call.1} parent=1 // pred_fallthru
      _
    // Predicated region
    $region14: #{tpu_custom_call.1} parent=1 // pred_check
      _
    $region15: #{tpu_custom_call.1} parent=1 // pred_check_branch
      %39 = sbr.rel (0) target = $region17
    $region16: #{tpu_custom_call.1} parent=1 // pred_region
      %41 = vsyncadd [#allocation5], 0
      %s42 = sshll.u32 %s3, 4
      %s43 = int_to_ptr.hbm [resolvable:$true] %s42
      %s44 = sshll.u32 [#allocation6], 4
      %s45 = int_to_ptr.vmem [resolvable:$true] %s44
      %50 = dma.hbm_to_vmem [thread:$0]  %s43, 1024, %s45, [#allocation5], 64, 64, 4
    $region17: #{tpu_custom_call.1} parent=1 // pred_fallthru
      _
    // Predicated region
    $region18: #{tpu_custom_call.1} parent=1 // pred_check
      _
    $region19: #{tpu_custom_call.1} parent=1 // pred_check_branch
      %52 = sbr.rel (0) target = $region21
    $region20: #{tpu_custom_call.1} parent=1 // pred_region
      _
    $region21: #{tpu_custom_call.1} parent=1 // pred_fallthru
      _
    // Predicated region
    $region22: #{tpu_custom_call.1} parent=1 // pred_check
      _
    $region23: #{tpu_custom_call.1} parent=1 // pred_check_branch
      %54 = sbr.rel (0) target = $region25
    $region24: #{tpu_custom_call.1} parent=1 // pred_region
      %56 = dma.done [#allocation3], 128
    $region25: #{tpu_custom_call.1} parent=1 // pred_fallthru
      _
    // Predicated region
    $region26: #{tpu_custom_call.1} parent=1 // pred_check
      _
    $region27: #{tpu_custom_call.1} parent=1 // pred_check_branch
      %58 = sbr.rel (0) target = $region29
    $region28: #{tpu_custom_call.1} parent=1 // pred_region
      %60 = dma.done [#allocation5], 256
    $region29: #{tpu_custom_call.1} parent=1 // pred_fallthru
      _
    // Predicated region
    $region30: #{tpu_custom_call.1} parent=1 // pred_check
      _
    $region31: #{tpu_custom_call.1} parent=1 // pred_check_branch
      %62 = sbr.rel (0) target = $region33
    $region32: #{tpu_custom_call.1} parent=1 // pred_region
      %64 = dma.done [#allocation5], 1024
    $region33: #{tpu_custom_call.1} parent=1 // pred_fallthru
      _
    %v66 = vld [vmem:[#allocation2] sm:$0xff]
    %v67 = vpack.c.bf16 %v66, %v66
    %v68 = vld [vmem:[#allocation4] sm:$0xf]
    %v69 = vld [vmem:[#allocation4 + $0x4] sm:$0xf]
    %v70 = vld [vmem:[#allocation4 + $0x8] sm:$0xf]
    %v71 = vld [vmem:[#allocation4 + $0xc] sm:$0xf]
    %v72 = vld [vmem:[%s2] sm:$0x1]
    %v74 = vperm.slane %v72, 0
    %v80 = vunpack.c.l.b16 %v68
    %v81 = vunpack.c.l.b16 %v69
    %v82 = vunpack.c.l.b16 %v70
    %v83 = vunpack.c.l.b16 %v71
    %v84 = vpack.c.b16 %v81, %v80
    %v85 = vpack.c.b16 %v83, %v82
    %vm88 = vcmask 261120
    %v90 = vsel %vm88, %v67, 0
    %92 = vmatpush.bf16.msra.mxu0 0
    %93 = vmatpush.bf16.msra.mxu0 0
    %94 = vmatpush.bf16.msra.mxu0 0
    %95 = vmatpush.bf16.msra.mxu0 0
    %96 = vmatpush.bf16.msra.mxu0 0
    %97 = vmatpush.bf16.msra.mxu0 0
    %98 = vmatpush.bf16.msra.mxu0 %v85
    %99 = vmatpush.bf16.msra.mxu0 %v84
    %100 = vmatmul.bf16.gmra.mxu0 %v90
    %v101 = vpop.f32.mrf.mxu0
    %v102 = vadd.f32 %v74, %v101
    %v103 = vpop.f32.mrf.mxu0
    %104 = vdwg.mxu0
    %v105 = vmax.f32 %v102, 0.0
    %v106 = vpack.c.bf16 %v105, %v105
    %v107 = vld [vmem:[#allocation6] sm:$0xf]
    %v108 = vld [vmem:[#allocation6 + $0x4] sm:$0xf]
    %v109 = vld [vmem:[#allocation6 + $0x8] sm:$0xf]
    %v110 = vld [vmem:[#allocation6 + $0xc] sm:$0xf]
    %v111 = vld [vmem:[#allocation6 + $0x10] sm:$0xf]
    %v112 = vld [vmem:[#allocation6 + $0x14] sm:$0xf]
    %v113 = vld [vmem:[#allocation6 + $0x18] sm:$0xf]
    %v114 = vld [vmem:[#allocation6 + $0x1c] sm:$0xf]
    %v115 = vld [vmem:[#allocation6 + $0x20] sm:$0xf]
    %v116 = vld [vmem:[#allocation6 + $0x24] sm:$0xf]
    %v117 = vld [vmem:[#allocation6 + $0x28] sm:$0xf]
    %v118 = vld [vmem:[#allocation6 + $0x2c] sm:$0xf]
    %v119 = vld [vmem:[#allocation6 + $0x30] sm:$0xf]
    %v120 = vld [vmem:[#allocation6 + $0x34] sm:$0xf]
    %v121 = vld [vmem:[#allocation6 + $0x38] sm:$0xf]
    %v122 = vld [vmem:[#allocation6 + $0x3c] sm:$0xf]
    %v139 = vunpack.c.l.b16 %v107
    %v140 = vunpack.c.l.b16 %v108
    %v141 = vunpack.c.l.b16 %v109
    %v142 = vunpack.c.l.b16 %v110
    %v143 = vunpack.c.l.b16 %v111
    %v144 = vunpack.c.l.b16 %v112
    %v145 = vunpack.c.l.b16 %v113
    %v146 = vunpack.c.l.b16 %v114
    %v147 = vunpack.c.l.b16 %v115
    %v148 = vunpack.c.l.b16 %v116
    %v149 = vunpack.c.l.b16 %v117
    %v150 = vunpack.c.l.b16 %v118
    %v151 = vunpack.c.l.b16 %v119
    %v152 = vunpack.c.l.b16 %v120
    %v153 = vunpack.c.l.b16 %v121
    %v154 = vunpack.c.l.b16 %v122
    %v155 = vpack.c.b16 %v140, %v139
    %v156 = vpack.c.b16 %v142, %v141
    %v157 = vpack.c.b16 %v144, %v143
    %v158 = vpack.c.b16 %v146, %v145
    %v159 = vpack.c.b16 %v148, %v147
    %v160 = vpack.c.b16 %v150, %v149
    %v161 = vpack.c.b16 %v152, %v151
    %v162 = vpack.c.b16 %v154, %v153
    %171 = vmatpush.bf16.msra.mxu0 %v162
    %172 = vmatpush.bf16.msra.mxu0 %v161
    %173 = vmatpush.bf16.msra.mxu0 %v160
    %174 = vmatpush.bf16.msra.mxu0 %v159
    %175 = vmatpush.bf16.msra.mxu0 %v158
    %176 = vmatpush.bf16.msra.mxu0 %v157
    %177 = vmatpush.bf16.msra.mxu0 %v156
    %178 = vmatpush.bf16.msra.mxu0 %v155
    %179 = vmatmul.bf16.gmra.mxu0 %v106
    %v180 = vpop.f32.mrf.mxu0
    %v181 = vadd.f32 0.0, %v180
    %v182 = vpop.f32.mrf.mxu0
    %183 = vdwg.mxu0
    %v184 = vld [vmem:[%s4] sm:$0x1]
    %v186 = vperm.slane %v184, 0
    %v188 = vadd.f32 %v181, %v186
    %vm189 = vcmask 31744
    %190 = vst.msk [vmem:[%s5] sm:$0xff] %vm189, %v188
    // Predicated region
    $region34: #{tpu_custom_call.1} parent=1 // pred_check
      _
    $region35: #{tpu_custom_call.1} parent=1 // pred_check_branch
      %192 = sbr.rel (0) target = $region37
    $region36: #{tpu_custom_call.1} parent=1 // pred_region
      _
    $region37: #{tpu_custom_call.1} parent=1 // pred_fallthru
      _
    // Predicated region
    $region38: #{tpu_custom_call.1} parent=1 // pred_check
      _
    $region39: #{tpu_custom_call.1} parent=1 // pred_check_branch
      %194 = sbr.rel (0) target = $region41
    $region40: #{tpu_custom_call.1} parent=1 // pred_region
      _
    $region41: #{tpu_custom_call.1} parent=1 // pred_fallthru
      _
    %195 = vsyncpa [#allocation3], 1
    %196 = vsyncpa [#allocation5], 1

</llo_original>
